<compile_context>
chip_gen: v7x
topology: tpu7x:2x2x1
jax: 0.10.0
libtpu: 0.0.40
codegen_flags: <defaults>
</compile_context>

<pallas_src>
import functools

import numpy as np
import jax
import jax.numpy as jnp
from jax.experimental import pallas as pl
from jax.experimental.pallas import tpu as pltpu

H = 768           # hidden size fixed by the module (torch.nn.Linear(768, ...))
_TS_MAX = 1024    # max sequence-tile rows per grid step


# ---------------------------------------------------------------------------
# Fused kernel: entities head + masked-mean pooling
# ---------------------------------------------------------------------------
def _fused_kernel(x_ref, m_ref, we_ref, be_ref, ent_ref, pooled_ref,
                  num_acc, den_acc, *, seq_len, ts, ragged):
    """Processes one (ts, H) token tile of a single batch row.

    every step :  entities tile = x @ W_e + b_e           (MXU)
                  num_acc      += mask_tile @ x           (MXU masked token sum)
                  den_acc      += sum(mask_tile)
    last step  :  pooled = num_acc / den_acc              (0/0 -> NaN, matches torch)
    """
    s_idx = pl.program_id(1)
    n_s = pl.num_programs(1)

    x = x_ref[...]                       # (ts, H)  activation dtype
    m = m_ref[...]                       # (1, ts)  activation dtype

    # ---- per-token entities head (unmasked activations) --------------------
    # Out-of-range rows of a ragged last tile are discarded by the masked
    # output writeback, so no row masking is needed here.
    ent_ref[...] = (
        jnp.dot(x, we_ref[...], preferred_element_type=jnp.float32)
        + be_ref[...]
    ).astype(ent_ref.dtype)

    # ---- masked-mean pooling accumulation -----------------------------------
    @pl.when(s_idx == 0)
    def _init():
        num_acc[...] = jnp.zeros_like(num_acc)
        den_acc[...] = jnp.zeros_like(den_acc)

    if ragged:
        # Only the LAST tile can contain out-of-range (garbage) rows; gate the
        # full-tile select behind lax.cond so it runs once per batch row
        # instead of every sequence step.
        def _mask_tail(xv, mv):
            col = jax.lax.broadcasted_iota(jnp.int32, (1, ts), 1) + s_idx * ts
            mv = jnp.where(col < seq_len, mv, jnp.zeros_like(mv))
            row = jax.lax.broadcasted_iota(jnp.int32, (ts, 1), 0) + s_idx * ts
            xv = jnp.where(row < seq_len, xv, jnp.zeros_like(xv))
            return xv, mv

        x, m = jax.lax.cond(s_idx == n_s - 1, _mask_tail,
                            lambda xv, mv: (xv, mv), x, m)

    # masked token sum on the MXU: (1, ts) @ (ts, H) -> (1, H), f32 accumulate
    num_acc[...] += jnp.dot(m, x, preferred_element_type=jnp.float32)
    den_acc[...] += jnp.sum(m.astype(jnp.float32), axis=-1, keepdims=True)

    # ---- finalize: masked mean ----------------------------------------------
    @pl.when(s_idx == n_s - 1)
    def _finalize():
        # NaN/Inf for fully-masked rows matches the torch reference behavior.
        pooled_ref[...] = (num_acc[...] / den_acc[...]).astype(pooled_ref.dtype)


# ---------------------------------------------------------------------------
# Model.forward equivalent (post-encoder part)
# ---------------------------------------------------------------------------
def forward(last_hidden_state, attention_mask, w_fc, b_fc, w_e, b_e,
            *, ts_max=_TS_MAX):
    x = last_hidden_state
    b, s, h = x.shape
    dtype = x.dtype
    e = w_e.shape[-1]

    # glue: weights / biases in activation dtype (bf16 pass-through supported)
    w_e_k = w_e.astype(dtype)                              # (H, E)
    b_e_k = jnp.reshape(b_e, (1, e)).astype(dtype)         # (1, E)

    # glue: lane-dense mask (B, 1, S) cast to activation dtype
    # (torch: attmask.to(out.dtype); mask=None -> plain mean == ones mask)
    if attention_mask is None:
        mask = jnp.ones((b, 1, s), dtype)
    else:
        mask = jnp.reshape(attention_mask, (b, 1, s)).astype(dtype)

    # sequence tiling: whole sequence if small, else 1024-row tiles
    ts = s if s <= ts_max else ts_max
    n_s = pl.cdiv(s, ts)
    ragged = (s % ts) != 0

    kernel = functools.partial(_fused_kernel, seq_len=s, ts=ts, ragged=ragged)

    # VMEM budget: double-buffered tiles + weights + accumulators, with
    # headroom for compiler scratch (much tighter than a blanket 48 MiB).
    itemsize = jnp.dtype(dtype).itemsize
    buf_bytes = 2 * (ts * h + ts + ts * e + h * e + e) * itemsize   # dbl-buf io
    buf_bytes += 2 * h * 4 + (h + 8) * 4                            # pooled + acc
    vmem_limit = int(min(max(2 * buf_bytes + (8 << 20), 16 << 20), 64 << 20))

    grid_spec = pltpu.PrefetchScalarGridSpec(
        num_scalar_prefetch=0,
        grid=(b, n_s),                                   # (batch, seq tiles)
        in_specs=[
            pl.BlockSpec((None, ts, h), lambda bi, si: (bi, si, 0)),   # x tile
            pl.BlockSpec((None, 1, ts), lambda bi, si: (bi, 0, si)),   # mask
            pl.BlockSpec((h, e), lambda bi, si: (0, 0)),               # W_e
            pl.BlockSpec((1, e), lambda bi, si: (0, 0)),               # b_e
        ],
        out_specs=[
            pl.BlockSpec((None, ts, e), lambda bi, si: (bi, si, 0)),   # entities
            pl.BlockSpec((None, 1, h), lambda bi, si: (bi, 0, 0)),     # pooled
        ],
        scratch_shapes=[
            pltpu.VMEM((1, h), jnp.float32),   # masked token-sum accumulator
            pltpu.VMEM((1, 1), jnp.float32),   # mask-count accumulator
        ],
    )

    entities, pooled = pl.pallas_call(
        kernel,
        out_shape=(
            jax.ShapeDtypeStruct((b, s, e), dtype),        # un-padded entities
            jax.ShapeDtypeStruct((b, 1, h), jnp.float32),  # pooled (f32)
        ),
        grid_spec=grid_spec,
        compiler_params=pltpu.CompilerParams(
            dimension_semantics=("parallel", "arbitrary"),
            vmem_limit_bytes=vmem_limit,
        ),
    )(x, mask, w_e_k, b_e_k)

    # tiny fc head (B, 768) @ (768, C) in plain JAX: frees W_fc from VMEM and
    # avoids an M=1 MXU matmul inside the kernel.
    pooled2d = jnp.reshape(pooled, (b, h))
    logits = (pooled2d @ w_fc.astype(jnp.float32)
              + jnp.reshape(b_fc, (1, -1)).astype(jnp.float32)).astype(dtype)
    return logits, entities


# ---------------------------------------------------------------------------
if __name__ == "__main__":
    B, S = 2, 32
    num_classes, num_entities = 8, 16

    key = jax.random.PRNGKey(0)
    k_out, k_we, k_be, k_wfc, k_bfc = jax.random.split(key, 5)

    # stand-in for the phobert encoder's last_hidden_state
    last_hidden_state = jax.random.normal(k_out, (B, S, H), dtype=jnp.float32)
    lens = jnp.array([S, S - 12], dtype=jnp.int32)
    attention_mask = (jnp.arange(S)[None, :] < lens[:, None]).astype(jnp.int32)

    # deterministic nn.Linear-style parameters (stored transposed: y = x@W + b)
    bound = 1.0 / np.sqrt(H)
    w_e = jax.random.uniform(k_we, (H, num_entities), jnp.float32, -bound, bound)
    b_e = jax.random.uniform(k_be, (1, num_entities), jnp.float32, -bound, bound)
    w_fc = jax.random.uniform(k_wfc, (H, num_classes), jnp.float32, -bound, bound)
    b_fc = jax.random.uniform(k_bfc, (1, num_classes), jnp.float32, -bound, bound)

    # ---------------- f32 run + tight reference check -----------------------
    logits, entities = forward(last_hidden_state, attention_mask,
                               w_fc, b_fc, w_e, b_e)
    logits, entities = jax.block_until_ready((logits, entities))

    m3 = attention_mask.reshape(B, S, 1).astype(jnp.float32)
    ent_ref = last_hidden_state @ w_e + b_e
    pooled_ref = jnp.sum(last_hidden_state * m3, axis=1) / jnp.sum(m3, axis=1)
    logits_ref = pooled_ref @ w_fc + b_fc

    assert logits.shape == (B, num_classes)
    assert entities.shape == (B, S, num_entities)
    np.testing.assert_allclose(np.asarray(entities), np.asarray(ent_ref),
                               rtol=1e-4, atol=1e-4)
    np.testing.assert_allclose(np.asarray(logits), np.asarray(logits_ref),
                               rtol=1e-4, atol=1e-4)

    # ---------------- bf16 run (halved HBM traffic) + loose check ------------
    x_bf16 = last_hidden_state.astype(jnp.bfloat16)
    logits_bf, ent_bf = forward(x_bf16, attention_mask, w_fc, b_fc, w_e, b_e)
    logits_bf, ent_bf = jax.block_until_ready((logits_bf, ent_bf))

    x_up = x_bf16.astype(jnp.float32)
    we_up = w_e.astype(jnp.bfloat16).astype(jnp.float32)
    be_up = b_e.astype(jnp.bfloat16).astype(jnp.float32)
    ent_ref_bf = x_up @ we_up + be_up
    pooled_ref_bf = jnp.sum(x_up * m3, axis=1) / jnp.sum(m3, axis=1)
    logits_ref_bf = pooled_ref_bf @ w_fc + b_fc

    np.testing.assert_allclose(np.asarray(ent_bf.astype(jnp.float32)),
                               np.asarray(ent_ref_bf), rtol=5e-2, atol=5e-2)
    np.testing.assert_allclose(np.asarray(logits_bf.astype(jnp.float32)),
                               np.asarray(logits_ref_bf), rtol=5e-2, atol=5e-2)

    print("KERNEL_OK")
</pallas_src>

<mosaic_0001>
module attributes {stable_mosaic.version = 11 : i64} {
  func.func @_fused_kernel(%arg0: i32, %arg1: i32, %arg2: memref<1x32x768xf32, #tpu.memory_space<vmem>>, %arg3: memref<1x1x32xf32, #tpu.memory_space<vmem>>, %arg4: memref<768x16xf32, #tpu.memory_space<vmem>>, %arg5: memref<1x16xf32, #tpu.memory_space<vmem>>, %arg6: memref<1x32x16xf32, #tpu.memory_space<vmem>>, %arg7: memref<1x1x768xf32, #tpu.memory_space<vmem>>, %arg8: memref<1x768xf32, #tpu.memory_space<vmem>>, %arg9: memref<1x1xf32, #tpu.memory_space<vmem>>) attributes {dimension_semantics = [#tpu.dimension_semantics<parallel>, #tpu.dimension_semantics<arbitrary>], iteration_bounds = array<i64: 2, 1>, scalar_prefetch = 0 : i64, scratch_operands = 2 : i64, tpu.core_type = #tpu.core_type<tc>, window_params = [{transform_indices = @transform_0, window_bounds = array<i64: 1, 32, 768>}, {transform_indices = @transform_1, window_bounds = array<i64: 1, 1, 32>}, {pipeline_mode = #tpu.pipeline_mode<synchronous>, transform_indices = @transform_2, window_bounds = array<i64: 768, 16>}, {pipeline_mode = #tpu.pipeline_mode<synchronous>, transform_indices = @transform_3, window_bounds = array<i64: 1, 16>}, {transform_indices = @transform_4, window_bounds = array<i64: 1, 32, 16>}, {transform_indices = @transform_5, window_bounds = array<i64: 1, 1, 768>}]} {
    %c0 = arith.constant 0 : index
    %c0_0 = arith.constant 0 : index
    %c0_1 = arith.constant 0 : index
    %0 = vector.load %arg2[%c0, %c0_0, %c0_1] : memref<1x32x768xf32, #tpu.memory_space<vmem>>, vector<1x32x768xf32>
    %1 = vector.shape_cast %0 : vector<1x32x768xf32> to vector<32x768xf32>
    %c0_2 = arith.constant 0 : index
    %c0_3 = arith.constant 0 : index
    %c0_4 = arith.constant 0 : index
    %2 = vector.load %arg3[%c0_2, %c0_3, %c0_4] : memref<1x1x32xf32, #tpu.memory_space<vmem>>, vector<1x1x32xf32>
    %3 = vector.shape_cast %2 : vector<1x1x32xf32> to vector<1x32xf32>
    %c0_5 = arith.constant 0 : index
    %c0_6 = arith.constant 0 : index
    %4 = vector.load %arg4[%c0_5, %c0_6] : memref<768x16xf32, #tpu.memory_space<vmem>>, vector<768x16xf32>
    %cst = arith.constant dense<0.000000e+00> : vector<32x16xf32>
    %5 = tpu.matmul %1, %4, %cst {dimension_numbers = #tpu.dot_dimension_numbers<[1], [0], [0], [1], [0, 0, 1, 1], [], []>} : vector<32x768xf32>, vector<768x16xf32>, vector<32x16xf32> -> vector<32x16xf32>
    %c0_7 = arith.constant 0 : index
    %c0_8 = arith.constant 0 : index
    %6 = vector.load %arg5[%c0_7, %c0_8] : memref<1x16xf32, #tpu.memory_space<vmem>>, vector<1x16xf32>
    %7 = vector.broadcast %6 : vector<1x16xf32> to vector<32x16xf32>
    %8 = arith.addf %5, %7 : vector<32x16xf32>
    %c0_9 = arith.constant 0 : index
    %c0_10 = arith.constant 0 : index
    %c0_11 = arith.constant 0 : index
    %9 = vector.load %arg6[%c0_9, %c0_10, %c0_11] : memref<1x32x16xf32, #tpu.memory_space<vmem>>, vector<1x32x16xf32>
    %10 = vector.shape_cast %9 : vector<1x32x16xf32> to vector<32x16xf32>
    %11 = vector.shape_cast %8 : vector<32x16xf32> to vector<1x32x16xf32>
    tpu.vector_store %arg6[%c0_9, %c0_10, %c0_11], %11 {strides = array<i32>} : memref<1x32x16xf32, #tpu.memory_space<vmem>>, vector<1x32x16xf32>,
    %c0_i32 = arith.constant 0 : i32
    %12 = arith.cmpi eq, %arg1, %c0_i32 : i32
    %13 = arith.extui %12 : i1 to i32
    %c0_i32_12 = arith.constant 0 : i32
    %14 = arith.cmpi ne, %13, %c0_i32_12 : i32
    scf.if %14 {
      %cst_25 = arith.constant 0.000000e+00 : f32
      %27 = vector.broadcast %cst_25 : f32 to vector<1x768xf32>
      %c0_26 = arith.constant 0 : index
      %c0_27 = arith.constant 0 : index
      %28 = vector.load %arg8[%c0_26, %c0_27] : memref<1x768xf32, #tpu.memory_space<vmem>>, vector<1x768xf32>
      tpu.vector_store %arg8[%c0_26, %c0_27], %27 {strides = array<i32>} : memref<1x768xf32, #tpu.memory_space<vmem>>, vector<1x768xf32>,
      %cst_28 = arith.constant 0.000000e+00 : f32
      %29 = vector.broadcast %cst_28 : f32 to vector<1x1xf32>
      %c0_29 = arith.constant 0 : index
      %c0_30 = arith.constant 0 : index
      %30 = vector.load %arg9[%c0_29, %c0_30] : memref<1x1xf32, #tpu.memory_space<vmem>>, vector<1x1xf32>
      tpu.vector_store %arg9[%c0_29, %c0_30], %29 {strides = array<i32>} : memref<1x1xf32, #tpu.memory_space<vmem>>, vector<1x1xf32>,
    } else {
    }
    %c0_13 = arith.constant 0 : index
    %c0_14 = arith.constant 0 : index
    %15 = vector.load %arg8[%c0_13, %c0_14] : memref<1x768xf32, #tpu.memory_space<vmem>>, vector<1x768xf32>
    %cst_15 = arith.constant dense<0.000000e+00> : vector<1x768xf32>
    %16 = tpu.matmul %3, %1, %cst_15 {dimension_numbers = #tpu.dot_dimension_numbers<[1], [0], [0], [1], [0, 0, 1, 1], [], []>} : vector<1x32xf32>, vector<32x768xf32>, vector<1x768xf32> -> vector<1x768xf32>
    %17 = arith.addf %15, %16 : vector<1x768xf32>
    %c0_16 = arith.constant 0 : index
    %c0_17 = arith.constant 0 : index
    %18 = vector.load %arg8[%c0_16, %c0_17] : memref<1x768xf32, #tpu.memory_space<vmem>>, vector<1x768xf32>
    tpu.vector_store %arg8[%c0_16, %c0_17], %17 {strides = array<i32>} : memref<1x768xf32, #tpu.memory_space<vmem>>, vector<1x768xf32>,
    %c0_18 = arith.constant 0 : index
    %c0_19 = arith.constant 0 : index
    %19 = vector.load %arg9[%c0_18, %c0_19] : memref<1x1xf32, #tpu.memory_space<vmem>>, vector<1x1xf32>
    %cst_20 = arith.constant dense<0.000000e+00> : vector<1xf32>
    %20 = vector.multi_reduction <add>, %3, %cst_20 [1] : vector<1x32xf32> to vector<1xf32>
    %21 = vector.shape_cast %20 : vector<1xf32> to vector<1x1xf32>
    %22 = arith.addf %19, %21 : vector<1x1xf32>
    %c0_21 = arith.constant 0 : index
    %c0_22 = arith.constant 0 : index
    %23 = vector.load %arg9[%c0_21, %c0_22] : memref<1x1xf32, #tpu.memory_space<vmem>>, vector<1x1xf32>
    tpu.vector_store %arg9[%c0_21, %c0_22], %22 {strides = array<i32>} : memref<1x1xf32, #tpu.memory_space<vmem>>, vector<1x1xf32>,
    %c0_i32_23 = arith.constant 0 : i32
    %24 = arith.cmpi eq, %arg1, %c0_i32_23 : i32
    %25 = arith.extui %24 : i1 to i32
    %c0_i32_24 = arith.constant 0 : i32
    %26 = arith.cmpi ne, %25, %c0_i32_24 : i32
    scf.if %26 {
      %c0_25 = arith.constant 0 : index
      %c0_26 = arith.constant 0 : index
      %27 = vector.load %arg8[%c0_25, %c0_26] : memref<1x768xf32, #tpu.memory_space<vmem>>, vector<1x768xf32>
      %c0_27 = arith.constant 0 : index
      %c0_28 = arith.constant 0 : index
      %28 = vector.load %arg9[%c0_27, %c0_28] : memref<1x1xf32, #tpu.memory_space<vmem>>, vector<1x1xf32>
      %29 = vector.broadcast %28 : vector<1x1xf32> to vector<1x768xf32>
      %30 = arith.divf %27, %29 : vector<1x768xf32>
      %c0_29 = arith.constant 0 : index
      %c0_30 = arith.constant 0 : index
      %c0_31 = arith.constant 0 : index
      %31 = vector.load %arg7[%c0_29, %c0_30, %c0_31] : memref<1x1x768xf32, #tpu.memory_space<vmem>>, vector<1x1x768xf32>
      %32 = vector.shape_cast %31 : vector<1x1x768xf32> to vector<1x768xf32>
      %33 = vector.shape_cast %30 : vector<1x768xf32> to vector<1x1x768xf32>
      tpu.vector_store %arg7[%c0_29, %c0_30, %c0_31], %33 {strides = array<i32>} : memref<1x1x768xf32, #tpu.memory_space<vmem>>, vector<1x1x768xf32>,
    } else {
    }
    return
  }
  func.func @transform_0(%arg0: i32, %arg1: i32) -> (i32, i32, i32) {
    %c0_i32 = arith.constant 0 : i32
    %c0_i32_0 = arith.constant 0 : i32
    return %arg0, %arg1, %c0_i32 : i32, i32, i32
  }
  func.func @transform_1(%arg0: i32, %arg1: i32) -> (i32, i32, i32) {
    %c0_i32 = arith.constant 0 : i32
    %c0_i32_0 = arith.constant 0 : i32
    return %arg0, %c0_i32, %arg1 : i32, i32, i32
  }
  func.func @transform_2(%arg0: i32, %arg1: i32) -> (i32, i32) {
    %c0_i32 = arith.constant 0 : i32
    %c0_i32_0 = arith.constant 0 : i32
    %c0_i32_1 = arith.constant 0 : i32
    return %c0_i32, %c0_i32_0 : i32, i32
  }
  func.func @transform_3(%arg0: i32, %arg1: i32) -> (i32, i32) {
    %c0_i32 = arith.constant 0 : i32
    %c0_i32_0 = arith.constant 0 : i32
    %c0_i32_1 = arith.constant 0 : i32
    return %c0_i32, %c0_i32_0 : i32, i32
  }
  func.func @transform_4(%arg0: i32, %arg1: i32) -> (i32, i32, i32) {
    %c0_i32 = arith.constant 0 : i32
    %c0_i32_0 = arith.constant 0 : i32
    return %arg0, %arg1, %c0_i32 : i32, i32, i32
  }
  func.func @transform_5(%arg0: i32, %arg1: i32) -> (i32, i32, i32) {
    %c0_i32 = arith.constant 0 : i32
    %c0_i32_0 = arith.constant 0 : i32
    %c0_i32_1 = arith.constant 0 : i32
    return %arg0, %c0_i32, %c0_i32_0 : i32, i32, i32
  }
}

</mosaic_0001>

<llo_original>
// kernel: tpu_custom_call.1
$region0: #{tpu_custom_call.1}
  #allocation0 [shape = 'u32[]', space=smem, size = 0x4, offset = 0x4, fixed_abs, tag = 'smem constant byte address 0x4 - core index']
  #allocation1 [shape = 'u32[144,128]{1,0:T(1,128)}', space=vmem, size = 0x12000, scoped, tag = 'internal scratch']
  #allocation2 [shape = 'f32[1,768]{1,0:T(1,128)}', space=vmem, size = 0xc00, scoped, tag = 'scratch operand']
  #allocation3 [shape = 'f32[1,1]{1,0:T(1,128)}', space=vmem, size = 0x200, scoped, tag = 'scratch operand']
  %s0 = inlined_call_operand.vmem [shape: f32[2,32,768], index: 0, kind: input, shape index: {}]
  %s1 = inlined_call_operand.vmem [shape: f32[2,1,32], index: 1, kind: input, shape index: {}]
  %s2 = inlined_call_operand.vmem [shape: f32[768,16], index: 2, kind: input, shape index: {}]
  %s3 = inlined_call_operand.vmem [shape: f32[1,16], index: 3, kind: input, shape index: {}]
  %s4 = inlined_call_operand.vmem [shape: f32[2,32,16], index: 4, kind: output, shape index: {0}]
  %s5 = inlined_call_operand.hbm [shape: f32[2,1,768], index: 5, kind: output, shape index: {1}]
  %6 = xla_tuple %s4, %s5
  %s7 = sld [smem:[#allocation0]]
  $region65: #{tpu_custom_call.1} parent=0
    _
  %s9 = ssub.s32 1, %s7
  %s10 = scalar_select 0, %s9, %s7
  $region1: #{tpu_custom_call.1} parent=0
    #allocation4 [shape = 'u8[6144]{0}', space=vmem, size = 0x1800, scoped, tag = 'output window, operand 1']
    #allocation5 [shape = 's32[2]{0}', space=sflag, size = 0x8, scoped, tag = 'scoped memory for tpu_custom_call.1']
    %11 = vsyncpa [#allocation5], 0
    %s12 = scalar_lea.sflag [#allocation5], 1
    %13 = vsyncpa %s12, 0
    loop: start=0, step=1, limit=4
    $region2: #{tpu_custom_call.1} parent=1 // loop_pre_header
      _
    $region3: #{tpu_custom_call.1} parent=1 // loop_header
      %s15 = sphi 0, %s19
      %p16 = scmp.ge.s32.totalorder %s15, 4
      %s22 = sphi 0, %s34
      %s23 = sphi 0, %s30
      %s24 = sphi 0, %s22
      %s25 = sphi 0, %s23
      %s26 = sphi 0, %s24
      %s27 = sphi 0, %s25
      %s39 = sphi 0, %s41
      %s42 = sphi 0, %s39
      %s43 = sphi 0, %s42
      %s59 = sphi 0, %s43
      %s67 = sphi 0, %s69
      %s70 = sphi 0, %s67
      %s71 = sphi 0, %s70
      %s87 = sphi 0, %s71
      %s91 = sphi 0, %s91
      %s93 = sphi 0, %s91
      %s94 = sphi 0, %s93
      %s108 = sphi 0, %s94
      %s112 = sphi 0, %s112
      %s114 = sphi 0, %s112
      %s115 = sphi 0, %s114
      %s129 = sphi 0, %s115
      %s137 = sphi 0, %s139
      %s140 = sphi 0, %s137
      %s141 = sphi 0, %s140
      %s157 = sphi 0, %s141
      %s163 = sphi 0, %s165
      %s166 = sphi 0, %s163
      %s167 = sphi 0, %s166
      %s183 = sphi 0, %s167
    $region4: #{tpu_custom_call.1} parent=1 // loop_header_branch
      %18 = sbr.rel (%p16) target = $region8
    $region5: #{tpu_custom_call.1} parent=1 // loop_body
      %s20 = ssub.s32 %s15, 1
      %s21 = ssub.s32 %s15, 2
      %s28 = sadd.s32 1, %s23
      %p29 = scmp.ge.s32.totalorder %s28, 1
      %s30 = scalar_select %p29, 0, %s28
      %s31 = sadd.s32 1, %s22
      %s32 = scalar_select %p29, %s31, %s22
      %p33 = scmp.ge.s32.totalorder %s32, 2
      %s34 = scalar_select %p33, 0, %s32
      %s35 = ssub.s32 %s22, %s34
      %s36 = ssub.s32 %s23, %s30
      %s37 = sor.u32 %s35, %s36
      %p38 = scmp.eq.s32.totalorder %s37, 0
      %s40 = sadd.s32 %s39, 1
      %s41 = scalar_select %p38, %s39, %s40
      %p44 = pneg %p38
      %p45 = scmp.eq.s32.totalorder %s15, 1
      %p46 = por %p44, %p45
      %p47 = scmp.ne.s32.totalorder %s39, %s42
      %p48 = scmp.eq.s32.totalorder %s15, 0
      %p49 = por %p47, %p48
      %p50 = scmp.ne.s32.totalorder %s39, %s42
      %p51 = scmp.eq.s32.totalorder %s20, 1
      %p52 = por %p50, %p51
      %p53 = scmp.ne.s32.totalorder %s42, %s43
      %p54 = scmp.eq.s32.totalorder %s20, 0
      %p55 = por %p53, %p54
      %p56 = scmp.ne.s32.totalorder %s42, %s43
      %p57 = scmp.eq.s32.totalorder %s21, 1
      %p58 = por %p56, %p57
      %p60 = scmp.ne.s32.totalorder %s43, %s59
      %p61 = scmp.eq.s32.totalorder %s21, 0
      %p62 = por %p60, %p61
      %s63 = ssub.s32 %s22, %s34
      %s64 = ssub.s32 %s23, %s30
      %s65 = sor.u32 %s63, %s64
      %p66 = scmp.eq.s32.totalorder %s65, 0
      %s68 = sadd.s32 %s67, 1
      %s69 = scalar_select %p66, %s67, %s68
      %p72 = pneg %p66
      %p73 = scmp.eq.s32.totalorder %s15, 1
      %p74 = por %p72, %p73
      %p75 = scmp.ne.s32.totalorder %s67, %s70
      %p76 = scmp.eq.s32.totalorder %s15, 0
      %p77 = por %p75, %p76
      %p78 = scmp.ne.s32.totalorder %s67, %s70
      %p79 = scmp.eq.s32.totalorder %s20, 1
      %p80 = por %p78, %p79
      %p81 = scmp.ne.s32.totalorder %s70, %s71
      %p82 = scmp.eq.s32.totalorder %s20, 0
      %p83 = por %p81, %p82
      %p84 = scmp.ne.s32.totalorder %s70, %s71
      %p85 = scmp.eq.s32.totalorder %s21, 1
      %p86 = por %p84, %p85
      %p88 = scmp.ne.s32.totalorder %s71, %s87
      %p89 = scmp.eq.s32.totalorder %s21, 0
      %p90 = por %p88, %p89
      %s92 = sadd.s32 %s91, 1
      %p95 = scmp.eq.s32.totalorder %s15, 1
      %p96 = scmp.ne.s32.totalorder %s91, %s93
      %p97 = scmp.eq.s32.totalorder %s15, 0
      %p98 = por %p96, %p97
      %p99 = scmp.ne.s32.totalorder %s91, %s93
      %p100 = scmp.eq.s32.totalorder %s20, 1
      %p101 = por %p99, %p100
      %p102 = scmp.ne.s32.totalorder %s93, %s94
      %p103 = scmp.eq.s32.totalorder %s20, 0
      %p104 = por %p102, %p103
      %p105 = scmp.ne.s32.totalorder %s93, %s94
      %p106 = scmp.eq.s32.totalorder %s21, 1
      %p107 = por %p105, %p106
      %p109 = scmp.ne.s32.totalorder %s94, %s108
      %p110 = scmp.eq.s32.totalorder %s21, 0
      %p111 = por %p109, %p110
      %s113 = sadd.s32 %s112, 1
      %p116 = scmp.eq.s32.totalorder %s15, 1
      %p117 = scmp.ne.s32.totalorder %s112, %s114
      %p118 = scmp.eq.s32.totalorder %s15, 0
      %p119 = por %p117, %p118
      %p120 = scmp.ne.s32.totalorder %s112, %s114
      %p121 = scmp.eq.s32.totalorder %s20, 1
      %p122 = por %p120, %p121
      %p123 = scmp.ne.s32.totalorder %s114, %s115
      %p124 = scmp.eq.s32.totalorder %s20, 0
      %p125 = por %p123, %p124
      %p126 = scmp.ne.s32.totalorder %s114, %s115
      %p127 = scmp.eq.s32.totalorder %s21, 1
      %p128 = por %p126, %p127
      %p130 = scmp.ne.s32.totalorder %s115, %s129
      %p131 = scmp.eq.s32.totalorder %s21, 0
      %p132 = por %p130, %p131
      %s133 = ssub.s32 %s22, %s34
      %s134 = ssub.s32 %s23, %s30
      %s135 = sor.u32 %s133, %s134
      %p136 = scmp.eq.s32.totalorder %s135, 0
      %s138 = sadd.s32 %s137, 1
      %s139 = scalar_select %p136, %s137, %s138
      %p142 = pneg %p136
      %p143 = scmp.eq.s32.totalorder %s15, 1
      %p144 = por %p142, %p143
      %p145 = scmp.ne.s32.totalorder %s137, %s140
      %p146 = scmp.eq.s32.totalorder %s15, 0
      %p147 = por %p145, %p146
      %p148 = scmp.ne.s32.totalorder %s137, %s140
      %p149 = scmp.eq.s32.totalorder %s20, 1
      %p150 = por %p148, %p149
      %p151 = scmp.ne.s32.totalorder %s140, %s141
      %p152 = scmp.eq.s32.totalorder %s20, 0
      %p153 = por %p151, %p152
      %p154 = scmp.ne.s32.totalorder %s140, %s141
      %p155 = scmp.eq.s32.totalorder %s21, 1
      %p156 = por %p154, %p155
      %p158 = scmp.ne.s32.totalorder %s141, %s157
      %p159 = scmp.eq.s32.totalorder %s21, 0
      %p160 = por %p158, %p159
      %s161 = ssub.s32 %s22, %s34
      %p162 = scmp.eq.s32.totalorder %s161, 0
      %s164 = sadd.s32 %s163, 1
      %s165 = scalar_select %p162, %s163, %s164
      %p168 = pneg %p162
      %p169 = scmp.eq.s32.totalorder %s15, 1
      %p170 = por %p168, %p169
      %p171 = scmp.ne.s32.totalorder %s163, %s166
      %p172 = scmp.eq.s32.totalorder %s15, 0
      %p173 = por %p171, %p172
      %p174 = scmp.ne.s32.totalorder %s163, %s166
      %p175 = scmp.eq.s32.totalorder %s20, 1
      %p176 = por %p174, %p175
      %p177 = scmp.ne.s32.totalorder %s166, %s167
      %p178 = scmp.eq.s32.totalorder %s20, 0
      %p179 = por %p177, %p178
      %p180 = scmp.ne.s32.totalorder %s166, %s167
      %p181 = scmp.eq.s32.totalorder %s21, 1
      %p182 = por %p180, %p181
      %p184 = scmp.ne.s32.totalorder %s167, %s183
      %p185 = scmp.eq.s32.totalorder %s21, 0
      %p186 = por %p184, %p185
      %p187 = scmp.le.s32.totalorder 1, %s15
      %p188 = scmp.lt.s32.totalorder %s15, 3
      %p189 = pnand %p187, %p188
      %p190 = pneg %p189
      // Predicated region
      $region9: #{tpu_custom_call.1} parent=5 // pred_check
        _
      $region10: #{tpu_custom_call.1} parent=5 // pred_check_branch
        %192 = sbr.rel (%p189) target = $region12
      $region11: #{tpu_custom_call.1} parent=5 // pred_region
        %s193 = ssub.s32 %s15, 1
        // Predicated region
        $region13: #{tpu_custom_call.1} parent=11 // pred_check
          %p194 = pneg %p104
        $region14: #{tpu_custom_call.1} parent=11 // pred_check_branch
          %196 = sbr.rel (%p194) target = $region16
        $region15: #{tpu_custom_call.1} parent=11 // pred_region
          _
        $region16: #{tpu_custom_call.1} parent=11 // pred_fallthru
          _
        // Predicated region
        $region17: #{tpu_custom_call.1} parent=11 // pred_check
          %p197 = pneg %p125
        $region18: #{tpu_custom_call.1} parent=11 // pred_check_branch
          %199 = sbr.rel (%p197) target = $region20
        $region19: #{tpu_custom_call.1} parent=11 // pred_region
          _
        $region20: #{tpu_custom_call.1} parent=11 // pred_fallthru
          _
      $region12: #{tpu_custom_call.1} parent=5 // pred_fallthru
        _
      %p200 = scmp.lt.s32.totalorder %s15, 2
      // Predicated region
      $region21: #{tpu_custom_call.1} parent=5 // pred_check
        %p201 = pneg %p200
      $region22: #{tpu_custom_call.1} parent=5 // pred_check_branch
        %203 = sbr.rel (%p201) target = $region24
      $region23: #{tpu_custom_call.1} parent=5 // pred_region
        // Predicated region
        $region25: #{tpu_custom_call.1} parent=23 // pred_check
          %p204 = pneg %p49
        $region26: #{tpu_custom_call.1} parent=23 // pred_check_branch
          %206 = sbr.rel (%p204) target = $region28
        $region27: #{tpu_custom_call.1} parent=23 // pred_region
          %s207 = smul.u32 4, %s23
          %p208 = scmp.lt.s32.totalorder %s22, 1
          %s209 = scalar_select %p208, %s22, 1
          %p210 = scmp.lt.s32.totalorder %s207, 3
          %s211 = scalar_select %p210, %s207, 3
          %s212 = smul.addr %s211, 6
          %s213 = smul.addr %s209, 24
          %s214 = sadd.s32 %s212, %s213
          %s215 = smul.addr %s214, 8
          %s216 = scalar_lea.vmem %s0, %s215
          %s217 = smul.u32 4, %s23
        $region28: #{tpu_custom_call.1} parent=23 // pred_fallthru
          _
        // Predicated region
        $region29: #{tpu_custom_call.1} parent=23 // pred_check
          %p218 = pneg %p77
        $region30: #{tpu_custom_call.1} parent=23 // pred_check_branch
          %220 = sbr.rel (%p218) target = $region32
        $region31: #{tpu_custom_call.1} parent=23 // pred_region
          %p221 = scmp.lt.s32.totalorder %s22, 1
          %s222 = scalar_select %p221, %s22, 1
          %p223 = scmp.lt.s32.totalorder %s23, 0
          %s224 = scalar_select %p223, %s23, 0
          %s225 = sadd.s32 %s224, %s222
          %s226 = scalar_lea.vmem %s1, %s225
        $region32: #{tpu_custom_call.1} parent=23 // pred_fallthru
          _
      $region24: #{tpu_custom_call.1} parent=5 // pred_fallthru
        _
      %p227 = scmp.le.s32.totalorder 1, %s15
      %p228 = scmp.lt.s32.totalorder %s15, 3
      %p229 = pnand %p227, %p228
      %p230 = pneg %p229
      // Predicated region
      $region33: #{tpu_custom_call.1} parent=5 // pred_check
        _
      $region34: #{tpu_custom_call.1} parent=5 // pred_check_branch
        %232 = sbr.rel (%p229) target = $region36
      $region35: #{tpu_custom_call.1} parent=5 // pred_region
        %s233 = ssub.s32 %s15, 1
        %s234 = smul.u32 4, %s25
        %p235 = scmp.lt.s32.totalorder %s24, 1
        %s236 = scalar_select %p235, %s24, 1
        %p237 = scmp.lt.s32.totalorder %s234, 3
        %s238 = scalar_select %p237, %s234, 3
        %s239 = smul.addr %s238, 6
        %s240 = smul.addr %s236, 24
        %s241 = sadd.s32 %s239, %s240
        %s242 = smul.addr %s241, 8
        %s243 = scalar_lea.vmem %s0, %s242
        %p244 = pneg %p55
        %p245 = pneg %p52
        %p246 = scmp.lt.s32.totalorder %s24, 1
        %s247 = scalar_select %p246, %s24, 1
        %p248 = scmp.lt.s32.totalorder %s25, 0
        %s249 = scalar_select %p248, %s25, 0
        %s250 = sadd.s32 %s249, %s247
        %s251 = scalar_lea.vmem %s1, %s250
        %p252 = pneg %p83
        %p253 = pneg %p80
        %p254 = pneg %p104
        %p255 = pneg %p101
        %p256 = pneg %p125
        %p257 = pneg %p122
        %p258 = pneg %p153
        %p259 = pneg %p150
        %s260 = smul.u32 4, %s25
        %p261 = scmp.lt.s32.totalorder %s24, 1
        %s262 = scalar_select %p261, %s24, 1
        %p263 = scmp.lt.s32.totalorder %s260, 3
        %s264 = scalar_select %p263, %s260, 3
        %s265 = smul.addr %s262, 4
        %s266 = sadd.s32 %s264, %s265
        %s267 = smul.addr %s266, 8
        %s268 = scalar_lea.vmem %s4, %s267
        %p269 = pneg %p179
        %p270 = pneg %p176
        %s271 = sand.u32 %s166, 1
        %s272 = scalar_lea.sflag [#allocation5], %s271
        %s273 = sand.u32 %s166, 1
        %s274 = smul.addr %s273, 6
        %s275 = scalar_lea.vmem [#allocation4], %s274
        %s276 = smul.u32 4, %s25
        %p277 = scmp.lt.s32.totalorder %s24, 1
        %s278 = scalar_select %p277, %s24, 1
        %p279 = scmp.lt.s32.totalorder %s276, 3
        %s280 = scalar_select %p279, %s276, 3
        %s281 = smul.addr %s280, 6
        %s282 = smul.addr %s278, 24
        %s283 = sadd.s32 %s281, %s282
        %s284 = smul.addr %s283, 8
        %s285 = scalar_lea.vmem %s0, %s284
        %s286 = smul.u32 4, %s25
        %p287 = scmp.lt.s32.totalorder %s24, 1
        %s288 = scalar_select %p287, %s24, 1
        %p289 = scmp.lt.s32.totalorder %s25, 0
        %s290 = scalar_select %p289, %s25, 0
        %s291 = sadd.s32 %s290, %s288
        %s292 = scalar_lea.vmem %s1, %s291
        %s293 = smul.u32 4, %s25
        %p294 = scmp.lt.s32.totalorder %s24, 1
        %s295 = scalar_select %p294, %s24, 1
        %p296 = scmp.lt.s32.totalorder %s293, 3
        %s297 = scalar_select %p296, %s293, 3
        %s298 = smul.addr %s295, 4
        %s299 = sadd.s32 %s297, %s298
        %s300 = smul.addr %s299, 8
        %s301 = scalar_lea.vmem %s4, %s300
        %s302 = smul.u32 4, %s25
        %v303 = vld [vmem:[%s285] sm:$0xff]
        %v304 = vld [vmem:[%s285 + $0x8] sm:$0xff]
        %v305 = vld [vmem:[%s285 + $0x10] sm:$0xff]
        %v306 = vld [vmem:[%s285 + $0x18] sm:$0xff]
        %v307 = vld [vmem:[%s285 + $0x20] sm:$0xff]
        %v308 = vld [vmem:[%s285 + $0x28] sm:$0xff]
        %v309 = vld [vmem:[%s285 + $0x30] sm:$0xff]
        %v310 = vld [vmem:[%s285 + $0x38] sm:$0xff]
        %v311 = vld [vmem:[%s285 + $0x40] sm:$0xff]
        %v312 = vld [vmem:[%s285 + $0x48] sm:$0xff]
        %v313 = vld [vmem:[%s285 + $0x50] sm:$0xff]
        %v314 = vld [vmem:[%s285 + $0x58] sm:$0xff]
        %v315 = vld [vmem:[%s285 + $0x60] sm:$0xff]
        %v316 = vld [vmem:[%s285 + $0x68] sm:$0xff]
        %v317 = vld [vmem:[%s285 + $0x70] sm:$0xff]
        %v318 = vld [vmem:[%s285 + $0x78] sm:$0xff]
        %v319 = vld [vmem:[%s285 + $0x80] sm:$0xff]
        %v320 = vld [vmem:[%s285 + $0x88] sm:$0xff]
        %v321 = vld [vmem:[%s285 + $0x90] sm:$0xff]
        %v322 = vld [vmem:[%s285 + $0x98] sm:$0xff]
        %v323 = vld [vmem:[%s285 + $0xa0] sm:$0xff]
        %v324 = vld [vmem:[%s285 + $0xa8] sm:$0xff]
        %v325 = vld [vmem:[%s285 + $0xb0] sm:$0xff]
        %v326 = vld [vmem:[%s285 + $0xb8] sm:$0xff]
        %v327 = vld [vmem:[%s292] sm:$0x1]
        %v328 = vld [vmem:[%s2] sm:$0xff]
        %v329 = vld [vmem:[%s2 + $0x8] sm:$0xff]
        %v330 = vld [vmem:[%s2 + $0x10] sm:$0xff]
        %v331 = vld [vmem:[%s2 + $0x18] sm:$0xff]
        %v332 = vld [vmem:[%s2 + $0x20] sm:$0xff]
        %v333 = vld [vmem:[%s2 + $0x28] sm:$0xff]
        %v334 = vld [vmem:[%s2 + $0x30] sm:$0xff]
        %v335 = vld [vmem:[%s2 + $0x38] sm:$0xff]
        %v336 = vld [vmem:[%s2 + $0x40] sm:$0xff]
        %v337 = vld [vmem:[%s2 + $0x48] sm:$0xff]
        %v338 = vld [vmem:[%s2 + $0x50] sm:$0xff]
        %v339 = vld [vmem:[%s2 + $0x58] sm:$0xff]
        %v340 = vld [vmem:[%s2 + $0x60] sm:$0xff]
        %v341 = vld [vmem:[%s2 + $0x68] sm:$0xff]
        %v342 = vld [vmem:[%s2 + $0x70] sm:$0xff]
        %v343 = vld [vmem:[%s2 + $0x78] sm:$0xff]
        %v344 = vld [vmem:[%s2 + $0x80] sm:$0xff]
        %v345 = vld [vmem:[%s2 + $0x88] sm:$0xff]
        %v346 = vld [vmem:[%s2 + $0x90] sm:$0xff]
        %v347 = vld [vmem:[%s2 + $0x98] sm:$0xff]
        %v348 = vld [vmem:[%s2 + $0xa0] sm:$0xff]
        %v349 = vld [vmem:[%s2 + $0xa8] sm:$0xff]
        %v350 = vld [vmem:[%s2 + $0xb0] sm:$0xff]
        %v351 = vld [vmem:[%s2 + $0xb8] sm:$0xff]
        %v352 = vld [vmem:[%s2 + $0xc0] sm:$0xff]
        %v353 = vld [vmem:[%s2 + $0xc8] sm:$0xff]
        %v354 = vld [vmem:[%s2 + $0xd0] sm:$0xff]
        %v355 = vld [vmem:[%s2 + $0xd8] sm:$0xff]
        %v356 = vld [vmem:[%s2 + $0xe0] sm:$0xff]
        %v357 = vld [vmem:[%s2 + $0xe8] sm:$0xff]
        %v358 = vld [vmem:[%s2 + $0xf0] sm:$0xff]
        %v359 = vld [vmem:[%s2 + $0xf8] sm:$0xff]
        %v360 = vld [vmem:[%s2 + $0x100] sm:$0xff]
        %v361 = vld [vmem:[%s2 + $0x108] sm:$0xff]
        %v362 = vld [vmem:[%s2 + $0x110] sm:$0xff]
        %v363 = vld [vmem:[%s2 + $0x118] sm:$0xff]
        %v364 = vld [vmem:[%s2 + $0x120] sm:$0xff]
        %v365 = vld [vmem:[%s2 + $0x128] sm:$0xff]
        %v366 = vld [vmem:[%s2 + $0x130] sm:$0xff]
        %v367 = vld [vmem:[%s2 + $0x138] sm:$0xff]
        %v368 = vld [vmem:[%s2 + $0x140] sm:$0xff]
        %v369 = vld [vmem:[%s2 + $0x148] sm:$0xff]
        %v370 = vld [vmem:[%s2 + $0x150] sm:$0xff]
        %v371 = vld [vmem:[%s2 + $0x158] sm:$0xff]
        %v372 = vld [vmem:[%s2 + $0x160] sm:$0xff]
        %v373 = vld [vmem:[%s2 + $0x168] sm:$0xff]
        %v374 = vld [vmem:[%s2 + $0x170] sm:$0xff]
        %v375 = vld [vmem:[%s2 + $0x178] sm:$0xff]
        %v376 = vld [vmem:[%s2 + $0x180] sm:$0xff]
        %v377 = vld [vmem:[%s2 + $0x188] sm:$0xff]
        %v378 = vld [vmem:[%s2 + $0x190] sm:$0xff]
        %v379 = vld [vmem:[%s2 + $0x198] sm:$0xff]
        %v380 = vld [vmem:[%s2 + $0x1a0] sm:$0xff]
        %v381 = vld [vmem:[%s2 + $0x1a8] sm:$0xff]
        %v382 = vld [vmem:[%s2 + $0x1b0] sm:$0xff]
        %v383 = vld [vmem:[%s2 + $0x1b8] sm:$0xff]
        %v384 = vld [vmem:[%s2 + $0x1c0] sm:$0xff]
        %v385 = vld [vmem:[%s2 + $0x1c8] sm:$0xff]
        %v386 = vld [vmem:[%s2 + $0x1d0] sm:$0xff]
        %v387 = vld [vmem:[%s2 + $0x1d8] sm:$0xff]
        %v388 = vld [vmem:[%s2 + $0x1e0] sm:$0xff]
        %v389 = vld [vmem:[%s2 + $0x1e8] sm:$0xff]
        %v390 = vld [vmem:[%s2 + $0x1f0] sm:$0xff]
        %v391 = vld [vmem:[%s2 + $0x1f8] sm:$0xff]
        %v392 = vld [vmem:[%s2 + $0x200] sm:$0xff]
        %v393 = vld [vmem:[%s2 + $0x208] sm:$0xff]
        %v394 = vld [vmem:[%s2 + $0x210] sm:$0xff]
        %v395 = vld [vmem:[%s2 + $0x218] sm:$0xff]
        %v396 = vld [vmem:[%s2 + $0x220] sm:$0xff]
        %v397 = vld [vmem:[%s2 + $0x228] sm:$0xff]
        %v398 = vld [vmem:[%s2 + $0x230] sm:$0xff]
        %v399 = vld [vmem:[%s2 + $0x238] sm:$0xff]
        %v400 = vld [vmem:[%s2 + $0x240] sm:$0xff]
        %v401 = vld [vmem:[%s2 + $0x248] sm:$0xff]
        %v402 = vld [vmem:[%s2 + $0x250] sm:$0xff]
        %v403 = vld [vmem:[%s2 + $0x258] sm:$0xff]
        %v404 = vld [vmem:[%s2 + $0x260] sm:$0xff]
        %v405 = vld [vmem:[%s2 + $0x268] sm:$0xff]
        %v406 = vld [vmem:[%s2 + $0x270] sm:$0xff]
        %v407 = vld [vmem:[%s2 + $0x278] sm:$0xff]
        %v408 = vld [vmem:[%s2 + $0x280] sm:$0xff]
        %v409 = vld [vmem:[%s2 + $0x288] sm:$0xff]
        %v410 = vld [vmem:[%s2 + $0x290] sm:$0xff]
        %v411 = vld [vmem:[%s2 + $0x298] sm:$0xff]
        %v412 = vld [vmem:[%s2 + $0x2a0] sm:$0xff]
        %v413 = vld [vmem:[%s2 + $0x2a8] sm:$0xff]
        %v414 = vld [vmem:[%s2 + $0x2b0] sm:$0xff]
        %v415 = vld [vmem:[%s2 + $0x2b8] sm:$0xff]
        %v416 = vld [vmem:[%s2 + $0x2c0] sm:$0xff]
        %v417 = vld [vmem:[%s2 + $0x2c8] sm:$0xff]
        %v418 = vld [vmem:[%s2 + $0x2d0] sm:$0xff]
        %v419 = vld [vmem:[%s2 + $0x2d8] sm:$0xff]
        %v420 = vld [vmem:[%s2 + $0x2e0] sm:$0xff]
        %v421 = vld [vmem:[%s2 + $0x2e8] sm:$0xff]
        %v422 = vld [vmem:[%s2 + $0x2f0] sm:$0xff]
        %v423 = vld [vmem:[%s2 + $0x2f8] sm:$0xff]
        %v424 = vld [vmem:[%s3] sm:$0x1]
        %v426 = vlaneseq
        %v427 = vshrl.u32 %v426, 7
        %v428 = vsub.s32 0, %v427
        %v429 = vrot.slane %v424, %v428
        %431 = vmatprep.subr.mxu0 0.0
        %432 = vmatpush1.msra.mxu0 %v328
        %433 = vmatprep.subr.mxu0 0.0
        %434 = vmatpush1.msra.mxu0 %v329
        %435 = vmatprep.subr.mxu0 0.0
        %436 = vmatpush1.msra.mxu0 %v330
        %437 = vmatprep.subr.mxu0 0.0
        %438 = vmatpush1.msra.mxu0 %v331
        %439 = vmatprep.subr.mxu0 0.0
        %440 = vmatpush1.msra.mxu0 %v332
        %441 = vmatprep.subr.mxu0 0.0
        %442 = vmatpush1.msra.mxu0 %v333
        %443 = vmatprep.subr.mxu0 0.0
        %444 = vmatpush1.msra.mxu0 %v334
        %445 = vmatprep.subr.mxu0 0.0
        %446 = vmatpush1.msra.mxu0 %v335
        %447 = vmatprep.subr.mxu0 0.0
        %448 = vmatpush1.msra.mxu0 %v336
        %449 = vmatprep.subr.mxu0 0.0
        %450 = vmatpush1.msra.mxu0 %v337
        %451 = vmatprep.subr.mxu0 0.0
        %452 = vmatpush1.msra.mxu0 %v338
        %453 = vmatprep.subr.mxu0 0.0
        %454 = vmatpush1.msra.mxu0 %v339
        %455 = vmatprep.subr.mxu0 0.0
        %456 = vmatpush1.msra.mxu0 %v340
        %457 = vmatprep.subr.mxu0 0.0
        %458 = vmatpush1.msra.mxu0 %v341
        %459 = vmatprep.subr.mxu0 0.0
        %460 = vmatpush1.msra.mxu0 %v342
        %461 = vmatprep.subr.mxu0 0.0
        %462 = vmatpush1.msra.mxu0 %v343
        %463 = vmatprep.subr.mxu0 0.0
        %464 = vmatpush1.msra.mxu0 %v344
        %465 = vmatprep.subr.mxu0 0.0
        %466 = vmatpush1.msra.mxu0 %v345
        %467 = vmatprep.subr.mxu0 0.0
        %468 = vmatpush1.msra.mxu0 %v346
        %469 = vmatprep.subr.mxu0 0.0
        %470 = vmatpush1.msra.mxu0 %v347
        %471 = vmatprep.subr.mxu0 0.0
        %472 = vmatpush1.msra.mxu0 %v348
        %473 = vmatprep.subr.mxu0 0.0
        %474 = vmatpush1.msra.mxu0 %v349
        %475 = vmatprep.subr.mxu0 0.0
        %476 = vmatpush1.msra.mxu0 %v350
        %477 = vmatprep.subr.mxu0 0.0
        %478 = vmatpush1.msra.mxu0 %v351
        %479 = vmatprep.subr.mxu0 0.0
        %480 = vmatpush1.msra.mxu0 %v352
        %481 = vmatprep.subr.mxu0 0.0
        %482 = vmatpush1.msra.mxu0 %v353
        %483 = vmatprep.subr.mxu0 0.0
        %484 = vmatpush1.msra.mxu0 %v354
        %485 = vmatprep.subr.mxu0 0.0
        %486 = vmatpush1.msra.mxu0 %v355
        %487 = vmatprep.subr.mxu0 0.0
        %488 = vmatpush1.msra.mxu0 %v356
        %489 = vmatprep.subr.mxu0 0.0
        %490 = vmatpush1.msra.mxu0 %v357
        %491 = vmatprep.subr.mxu0 0.0
        %492 = vmatpush1.msra.mxu0 %v358
        %493 = vmatprep.subr.mxu0 0.0
        %494 = vmatpush1.msra.mxu0 %v359
        %495 = vmatprep.mubr.f32.mxu0 %v304
        %496 = vmatmul.mubr.f32.gmra.mrb[0].mxu0 %v303
        %v497 = vpop.f32.mrb[0].mxu0
        %v498 = vadd.f32 %v429, %v497
        %v499 = vpop.f32.mrb[0].mxu0
        %500 = vmatprep.mubr.f32.mxu0 %v310
        %501 = vmatmul.mubr.f32.gmra.mrb[0].mxu0 %v309
        %v502 = vpop.f32.mrb[0].mxu0
        %v503 = vadd.f32 %v429, %v502
        %v504 = vpop.f32.mrb[0].mxu0
        %505 = vmatprep.mubr.f32.mxu0 %v316
        %506 = vmatmul.mubr.f32.gmra.mrb[0].mxu0 %v315
        %v507 = vpop.f32.mrb[0].mxu0
        %v508 = vadd.f32 %v429, %v507
        %v509 = vpop.f32.mrb[0].mxu0
        %510 = vmatprep.mubr.f32.mxu0 %v322
        %511 = vmatmul.mubr.f32.gmra.mrb[0].mxu0 %v321
        %v512 = vpop.f32.mrb[0].mxu0
        %v513 = vadd.f32 %v429, %v512
        %v514 = vpop.f32.mrb[0].mxu0
        %515 = vdwg.mxu0
        %516 = vmatprep.subr.mxu0 0.0
        %517 = vmatpush1.msra.mxu0 %v360
        %518 = vmatprep.subr.mxu0 0.0
        %519 = vmatpush1.msra.mxu0 %v361
        %520 = vmatprep.subr.mxu0 0.0
        %521 = vmatpush1.msra.mxu0 %v362
        %522 = vmatprep.subr.mxu0 0.0
        %523 = vmatpush1.msra.mxu0 %v363
        %524 = vmatprep.subr.mxu0 0.0
        %525 = vmatpush1.msra.mxu0 %v364
        %526 = vmatprep.subr.mxu0 0.0
        %527 = vmatpush1.msra.mxu0 %v365
        %528 = vmatprep.subr.mxu0 0.0
        %529 = vmatpush1.msra.mxu0 %v366
        %530 = vmatprep.subr.mxu0 0.0
        %531 = vmatpush1.msra.mxu0 %v367
        %532 = vmatprep.subr.mxu0 0.0
        %533 = vmatpush1.msra.mxu0 %v368
        %534 = vmatprep.subr.mxu0 0.0
        %535 = vmatpush1.msra.mxu0 %v369
        %536 = vmatprep.subr.mxu0 0.0
        %537 = vmatpush1.msra.mxu0 %v370
        %538 = vmatprep.subr.mxu0 0.0
        %539 = vmatpush1.msra.mxu0 %v371
        %540 = vmatprep.subr.mxu0 0.0
        %541 = vmatpush1.msra.mxu0 %v372
        %542 = vmatprep.subr.mxu0 0.0
        %543 = vmatpush1.msra.mxu0 %v373
        %544 = vmatprep.subr.mxu0 0.0
        %545 = vmatpush1.msra.mxu0 %v374
        %546 = vmatprep.subr.mxu0 0.0
        %547 = vmatpush1.msra.mxu0 %v375
        %548 = vmatprep.subr.mxu0 0.0
        %549 = vmatpush1.msra.mxu0 %v376
        %550 = vmatprep.subr.mxu0 0.0
        %551 = vmatpush1.msra.mxu0 %v377
        %552 = vmatprep.subr.mxu0 0.0
        %553 = vmatpush1.msra.mxu0 %v378
        %554 = vmatprep.subr.mxu0 0.0
        %555 = vmatpush1.msra.mxu0 %v379
        %556 = vmatprep.subr.mxu0 0.0
        %557 = vmatpush1.msra.mxu0 %v380
        %558 = vmatprep.subr.mxu0 0.0
        %559 = vmatpush1.msra.mxu0 %v381
        %560 = vmatprep.subr.mxu0 0.0
        %561 = vmatpush1.msra.mxu0 %v382
        %562 = vmatprep.subr.mxu0 0.0
        %563 = vmatpush1.msra.mxu0 %v383
        %564 = vmatprep.subr.mxu0 0.0
        %565 = vmatpush1.msra.mxu0 %v384
        %566 = vmatprep.subr.mxu0 0.0
        %567 = vmatpush1.msra.mxu0 %v385
        %568 = vmatprep.subr.mxu0 0.0
        %569 = vmatpush1.msra.mxu0 %v386
        %570 = vmatprep.subr.mxu0 0.0
        %571 = vmatpush1.msra.mxu0 %v387
        %572 = vmatprep.subr.mxu0 0.0
        %573 = vmatpush1.msra.mxu0 %v388
        %574 = vmatprep.subr.mxu0 0.0
        %575 = vmatpush1.msra.mxu0 %v389
        %576 = vmatprep.subr.mxu0 0.0
        %577 = vmatpush1.msra.mxu0 %v390
        %578 = vmatprep.subr.mxu0 0.0
        %579 = vmatpush1.msra.mxu0 %v391
        %580 = vmatprep.mubr.f32.mxu0 %v306
        %581 = vmatmul.mubr.f32.gmra.mrb[0].mxu0 %v305
        %v582 = vpop.f32.mrb[0].mxu0
        %v583 = vadd.f32 %v498, %v582
        %v584 = vpop.f32.mrb[0].mxu0
        %585 = vmatprep.mubr.f32.mxu0 %v312
        %586 = vmatmul.mubr.f32.gmra.mrb[0].mxu0 %v311
        %v587 = vpop.f32.mrb[0].mxu0
        %v588 = vadd.f32 %v503, %v587
        %v589 = vpop.f32.mrb[0].mxu0
        %590 = vmatprep.mubr.f32.mxu0 %v318
        %591 = vmatmul.mubr.f32.gmra.mrb[0].mxu0 %v317
        %v592 = vpop.f32.mrb[0].mxu0
        %v593 = vadd.f32 %v508, %v592
        %v594 = vpop.f32.mrb[0].mxu0
        %595 = vmatprep.mubr.f32.mxu0 %v324
        %596 = vmatmul.mubr.f32.gmra.mrb[0].mxu0 %v323
        %v597 = vpop.f32.mrb[0].mxu0
        %v598 = vadd.f32 %v513, %v597
        %v599 = vpop.f32.mrb[0].mxu0
        %600 = vdwg.mxu0
        %601 = vmatprep.subr.mxu0 0.0
        %602 = vmatpush1.msra.mxu0 %v392
        %603 = vmatprep.subr.mxu0 0.0
        %604 = vmatpush1.msra.mxu0 %v393
        %605 = vmatprep.subr.mxu0 0.0
        %606 = vmatpush1.msra.mxu0 %v394
        %607 = vmatprep.subr.mxu0 0.0
        %608 = vmatpush1.msra.mxu0 %v395
        %609 = vmatprep.subr.mxu0 0.0
        %610 = vmatpush1.msra.mxu0 %v396
        %611 = vmatprep.subr.mxu0 0.0
        %612 = vmatpush1.msra.mxu0 %v397
        %613 = vmatprep.subr.mxu0 0.0
        %614 = vmatpush1.msra.mxu0 %v398
        %615 = vmatprep.subr.mxu0 0.0
        %616 = vmatpush1.msra.mxu0 %v399
        %617 = vmatprep.subr.mxu0 0.0
        %618 = vmatpush1.msra.mxu0 %v400
        %619 = vmatprep.subr.mxu0 0.0
        %620 = vmatpush1.msra.mxu0 %v401
        %621 = vmatprep.subr.mxu0 0.0
        %622 = vmatpush1.msra.mxu0 %v402
        %623 = vmatprep.subr.mxu0 0.0
        %624 = vmatpush1.msra.mxu0 %v403
        %625 = vmatprep.subr.mxu0 0.0
        %626 = vmatpush1.msra.mxu0 %v404
        %627 = vmatprep.subr.mxu0 0.0
        %628 = vmatpush1.msra.mxu0 %v405
        %629 = vmatprep.subr.mxu0 0.0
        %630 = vmatpush1.msra.mxu0 %v406
        %631 = vmatprep.subr.mxu0 0.0
        %632 = vmatpush1.msra.mxu0 %v407
        %633 = vmatprep.subr.mxu0 0.0
        %634 = vmatpush1.msra.mxu0 %v408
        %635 = vmatprep.subr.mxu0 0.0
        %636 = vmatpush1.msra.mxu0 %v409
        %637 = vmatprep.subr.mxu0 0.0
        %638 = vmatpush1.msra.mxu0 %v410
        %639 = vmatprep.subr.mxu0 0.0
        %640 = vmatpush1.msra.mxu0 %v411
        %641 = vmatprep.subr.mxu0 0.0
        %642 = vmatpush1.msra.mxu0 %v412
        %643 = vmatprep.subr.mxu0 0.0
        %644 = vmatpush1.msra.mxu0 %v413
        %645 = vmatprep.subr.mxu0 0.0
        %646 = vmatpush1.msra.mxu0 %v414
        %647 = vmatprep.subr.mxu0 0.0
        %648 = vmatpush1.msra.mxu0 %v415
        %649 = vmatprep.subr.mxu0 0.0
        %650 = vmatpush1.msra.mxu0 %v416
        %651 = vmatprep.subr.mxu0 0.0
        %652 = vmatpush1.msra.mxu0 %v417
        %653 = vmatprep.subr.mxu0 0.0
        %654 = vmatpush1.msra.mxu0 %v418
        %655 = vmatprep.subr.mxu0 0.0
        %656 = vmatpush1.msra.mxu0 %v419
        %657 = vmatprep.subr.mxu0 0.0
        %658 = vmatpush1.msra.mxu0 %v420
        %659 = vmatprep.subr.mxu0 0.0
        %660 = vmatpush1.msra.mxu0 %v421
        %661 = vmatprep.subr.mxu0 0.0
        %662 = vmatpush1.msra.mxu0 %v422
        %663 = vmatprep.subr.mxu0 0.0
        %664 = vmatpush1.msra.mxu0 %v423
        %665 = vmatprep.mubr.f32.mxu0 %v308
        %666 = vmatmul.mubr.f32.gmra.mrb[0].mxu0 %v307
        %v667 = vpop.f32.mrb[0].mxu0
        %v668 = vadd.f32 %v583, %v667
        %v669 = vpop.f32.mrb[0].mxu0
        %670 = vmatprep.mubr.f32.mxu0 %v314
        %671 = vmatmul.mubr.f32.gmra.mrb[0].mxu0 %v313
        %v672 = vpop.f32.mrb[0].mxu0
        %v673 = vadd.f32 %v588, %v672
        %v674 = vpop.f32.mrb[0].mxu0
        %675 = vmatprep.mubr.f32.mxu0 %v320
        %676 = vmatmul.mubr.f32.gmra.mrb[0].mxu0 %v319
        %v677 = vpop.f32.mrb[0].mxu0
        %v678 = vadd.f32 %v593, %v677
        %v679 = vpop.f32.mrb[0].mxu0
        %680 = vmatprep.mubr.f32.mxu0 %v326
        %681 = vmatmul.mubr.f32.gmra.mrb[0].mxu0 %v325
        %v682 = vpop.f32.mrb[0].mxu0
        %v683 = vadd.f32 %v598, %v682
        %v684 = vpop.f32.mrb[0].mxu0
        %685 = vdwg.mxu0
        %vm686 = vcmask 130048
        %687 = vst.msk [vmem:[%s301] sm:$0xff] %vm686, %v668
        %688 = vst.msk [vmem:[%s301 + $0x8] sm:$0xff] %vm686, %v673
        %689 = vst.msk [vmem:[%s301 + $0x10] sm:$0xff] %vm686, %v678
        %690 = vst.msk [vmem:[%s301 + $0x18] sm:$0xff] %vm686, %v683
        %p691 = scmp.eq.s32.totalorder %s25, 0
        // Predicated region
        $region37: #{tpu_custom_call.1} parent=35 // pred_check
          %p692 = pneg %p691
        $region38: #{tpu_custom_call.1} parent=35 // pred_check_branch
          %694 = sbr.rel (%p692) target = $region40
        $region39: #{tpu_custom_call.1} parent=35 // pred_region
          %v695 = vlaneseq
          %vm696 = vcmp.ge.s32.totalorder %v695, 0
          %vm697 = vcmp.lt.s32.totalorder %v695, 768
          %vm698 = vmand %vm696, %vm697
          %699 = vst.msk [vmem:[#allocation2] sm:$0x3f] %vm698, 0.0
          %vm700 = vcmask 0
          %701 = vst.msk [vmem:[#allocation3] sm:$0x1] %vm700, 0.0
        $region40: #{tpu_custom_call.1} parent=35 // pred_fallthru
          _
        %v702 = vld [vmem:[#allocation2] sm:$0x3f]
        %vm703 = vcmask 261120
        %v705 = vsel %vm703, %v327, 0
        %707 = vmatprep.subr.mxu0 %v304
        %708 = vmatpush1.msra.mxu0 %v303
        %709 = vmatprep.subr.mxu0 %v310
        %710 = vmatpush1.msra.mxu0 %v309
        %711 = vmatprep.subr.mxu0 %v316
        %712 = vmatpush1.msra.mxu0 %v315
        %713 = vmatprep.subr.mxu0 %v322
        %714 = vmatpush1.msra.mxu0 %v321
        %715 = vmatprep.subr.mxu0 0.0
        %716 = vmatpush1.msra.mxu0 0.0
        %717 = vmatprep.subr.mxu0 0.0
        %718 = vmatpush1.msra.mxu0 0.0
        %719 = vmatprep.subr.mxu0 0.0
        %720 = vmatpush1.msra.mxu0 0.0
        %721 = vmatprep.subr.mxu0 0.0
        %722 = vmatpush1.msra.mxu0 0.0
        %723 = vmatprep.subr.mxu0 0.0
        %724 = vmatpush1.msra.mxu0 0.0
        %725 = vmatprep.subr.mxu0 0.0
        %726 = vmatpush1.msra.mxu0 0.0
        %727 = vmatprep.subr.mxu0 0.0
        %728 = vmatpush1.msra.mxu0 0.0
        %729 = vmatprep.subr.mxu0 0.0
        %730 = vmatpush1.msra.mxu0 0.0
        %731 = vmatprep.subr.mxu0 0.0
        %732 = vmatpush1.msra.mxu0 0.0
        %733 = vmatprep.subr.mxu0 0.0
        %734 = vmatpush1.msra.mxu0 0.0
        %735 = vmatprep.subr.mxu0 0.0
        %736 = vmatpush1.msra.mxu0 0.0
        %737 = vmatprep.subr.mxu0 0.0
        %738 = vmatpush1.msra.mxu0 0.0
        %739 = vmatprep.subr.mxu0 0.0
        %740 = vmatpush1.msra.mxu0 0.0
        %741 = vmatprep.subr.mxu0 0.0
        %742 = vmatpush1.msra.mxu0 0.0
        %743 = vmatprep.subr.mxu0 0.0
        %744 = vmatpush1.msra.mxu0 0.0
        %745 = vmatprep.subr.mxu0 0.0
        %746 = vmatpush1.msra.mxu0 0.0
        %747 = vmatprep.subr.mxu0 0.0
        %748 = vmatpush1.msra.mxu0 0.0
        %749 = vmatprep.subr.mxu0 0.0
        %750 = vmatpush1.msra.mxu0 0.0
        %751 = vmatprep.subr.mxu0 0.0
        %752 = vmatpush1.msra.mxu0 0.0
        %753 = vmatprep.subr.mxu0 0.0
        %754 = vmatpush1.msra.mxu0 0.0
        %755 = vmatprep.subr.mxu0 0.0
        %756 = vmatpush1.msra.mxu0 0.0
        %757 = vmatprep.subr.mxu0 0.0
        %758 = vmatpush1.msra.mxu0 0.0
        %759 = vmatprep.subr.mxu0 0.0
        %760 = vmatpush1.msra.mxu0 0.0
        %761 = vmatprep.subr.mxu0 0.0
        %762 = vmatpush1.msra.mxu0 0.0
        %763 = vmatprep.subr.mxu0 0.0
        %764 = vmatpush1.msra.mxu0 0.0
        %765 = vmatprep.subr.mxu0 0.0
        %766 = vmatpush1.msra.mxu0 0.0
        %767 = vmatprep.subr.mxu0 0.0
        %768 = vmatpush1.msra.mxu0 0.0
        %769 = vmatprep.subr.mxu0 0.0
        %770 = vmatpush1.msra.mxu0 0.0
        %771 = vmatprep.mubr.f32.mxu0 0.0
        %772 = vmatmul.mubr.f32.gmra.mrb[0].mxu0 %v705
        %v773 = vpop.f32.mrb[0].mxu0
        %v774 = vadd.f32 0.0, %v773
        %v775 = vpop.f32.mrb[0].mxu0
        %v776 = vadd.f32 0.0, %v775
        %777 = vdwg.mxu0
        %778 = vmatprep.subr.mxu0 %v306
        %779 = vmatpush1.msra.mxu0 %v305
        %780 = vmatprep.subr.mxu0 %v312
        %781 = vmatpush1.msra.mxu0 %v311
        %782 = vmatprep.subr.mxu0 %v318
        %783 = vmatpush1.msra.mxu0 %v317
        %784 = vmatprep.subr.mxu0 %v324
        %785 = vmatpush1.msra.mxu0 %v323
        %786 = vmatprep.subr.mxu0 0.0
        %787 = vmatpush1.msra.mxu0 0.0
        %788 = vmatprep.subr.mxu0 0.0
        %789 = vmatpush1.msra.mxu0 0.0
        %790 = vmatprep.subr.mxu0 0.0
        %791 = vmatpush1.msra.mxu0 0.0
        %792 = vmatprep.subr.mxu0 0.0
        %793 = vmatpush1.msra.mxu0 0.0
        %794 = vmatprep.subr.mxu0 0.0
        %795 = vmatpush1.msra.mxu0 0.0
        %796 = vmatprep.subr.mxu0 0.0
        %797 = vmatpush1.msra.mxu0 0.0
        %798 = vmatprep.subr.mxu0 0.0
        %799 = vmatpush1.msra.mxu0 0.0
        %800 = vmatprep.subr.mxu0 0.0
        %801 = vmatpush1.msra.mxu0 0.0
        %802 = vmatprep.subr.mxu0 0.0
        %803 = vmatpush1.msra.mxu0 0.0
        %804 = vmatprep.subr.mxu0 0.0
        %805 = vmatpush1.msra.mxu0 0.0
        %806 = vmatprep.subr.mxu0 0.0
        %807 = vmatpush1.msra.mxu0 0.0
        %808 = vmatprep.subr.mxu0 0.0
        %809 = vmatpush1.msra.mxu0 0.0
        %810 = vmatprep.subr.mxu0 0.0
        %811 = vmatpush1.msra.mxu0 0.0
        %812 = vmatprep.subr.mxu0 0.0
        %813 = vmatpush1.msra.mxu0 0.0
        %814 = vmatprep.subr.mxu0 0.0
        %815 = vmatpush1.msra.mxu0 0.0
        %816 = vmatprep.subr.mxu0 0.0
        %817 = vmatpush1.msra.mxu0 0.0
        %818 = vmatprep.subr.mxu0 0.0
        %819 = vmatpush1.msra.mxu0 0.0
        %820 = vmatprep.subr.mxu0 0.0
        %821 = vmatpush1.msra.mxu0 0.0
        %822 = vmatprep.subr.mxu0 0.0
        %823 = vmatpush1.msra.mxu0 0.0
        %824 = vmatprep.subr.mxu0 0.0
        %825 = vmatpush1.msra.mxu0 0.0
        %826 = vmatprep.subr.mxu0 0.0
        %827 = vmatpush1.msra.mxu0 0.0
        %828 = vmatprep.subr.mxu0 0.0
        %829 = vmatpush1.msra.mxu0 0.0
        %830 = vmatprep.subr.mxu0 0.0
        %831 = vmatpush1.msra.mxu0 0.0
        %832 = vmatprep.subr.mxu0 0.0
        %833 = vmatpush1.msra.mxu0 0.0
        %834 = vmatprep.subr.mxu0 0.0
        %835 = vmatpush1.msra.mxu0 0.0
        %836 = vmatprep.subr.mxu0 0.0
        %837 = vmatpush1.msra.mxu0 0.0
        %838 = vmatprep.subr.mxu0 0.0
        %839 = vmatpush1.msra.mxu0 0.0
        %840 = vmatprep.subr.mxu0 0.0
        %841 = vmatpush1.msra.mxu0 0.0
        %842 = vmatprep.mubr.f32.mxu0 0.0
        %843 = vmatmul.mubr.f32.gmra.mrb[0].mxu0 %v705
        %v844 = vpop.f32.mrb[0].mxu0
        %v845 = vadd.f32 0.0, %v844
        %v846 = vpop.f32.mrb[0].mxu0
        %v847 = vadd.f32 0.0, %v846
        %848 = vdwg.mxu0
        %849 = vmatprep.subr.mxu0 %v308
        %850 = vmatpush1.msra.mxu0 %v307
        %851 = vmatprep.subr.mxu0 %v314
        %852 = vmatpush1.msra.mxu0 %v313
        %853 = vmatprep.subr.mxu0 %v320
        %854 = vmatpush1.msra.mxu0 %v319
        %855 = vmatprep.subr.mxu0 %v326
        %856 = vmatpush1.msra.mxu0 %v325
        %857 = vmatprep.subr.mxu0 0.0
        %858 = vmatpush1.msra.mxu0 0.0
        %859 = vmatprep.subr.mxu0 0.0
        %860 = vmatpush1.msra.mxu0 0.0
        %861 = vmatprep.subr.mxu0 0.0
        %862 = vmatpush1.msra.mxu0 0.0
        %863 = vmatprep.subr.mxu0 0.0
        %864 = vmatpush1.msra.mxu0 0.0
        %865 = vmatprep.subr.mxu0 0.0
        %866 = vmatpush1.msra.mxu0 0.0
        %867 = vmatprep.subr.mxu0 0.0
        %868 = vmatpush1.msra.mxu0 0.0
        %869 = vmatprep.subr.mxu0 0.0
        %870 = vmatpush1.msra.mxu0 0.0
        %871 = vmatprep.subr.mxu0 0.0
        %872 = vmatpush1.msra.mxu0 0.0
        %873 = vmatprep.subr.mxu0 0.0
        %874 = vmatpush1.msra.mxu0 0.0
        %875 = vmatprep.subr.mxu0 0.0
        %876 = vmatpush1.msra.mxu0 0.0
        %877 = vmatprep.subr.mxu0 0.0
        %878 = vmatpush1.msra.mxu0 0.0
        %879 = vmatprep.subr.mxu0 0.0
        %880 = vmatpush1.msra.mxu0 0.0
        %881 = vmatprep.subr.mxu0 0.0
        %882 = vmatpush1.msra.mxu0 0.0
        %883 = vmatprep.subr.mxu0 0.0
        %884 = vmatpush1.msra.mxu0 0.0
        %885 = vmatprep.subr.mxu0 0.0
        %886 = vmatpush1.msra.mxu0 0.0
        %887 = vmatprep.subr.mxu0 0.0
        %888 = vmatpush1.msra.mxu0 0.0
        %889 = vmatprep.subr.mxu0 0.0
        %890 = vmatpush1.msra.mxu0 0.0
        %891 = vmatprep.subr.mxu0 0.0
        %892 = vmatpush1.msra.mxu0 0.0
        %893 = vmatprep.subr.mxu0 0.0
        %894 = vmatpush1.msra.mxu0 0.0
        %895 = vmatprep.subr.mxu0 0.0
        %896 = vmatpush1.msra.mxu0 0.0
        %897 = vmatprep.subr.mxu0 0.0
        %898 = vmatpush1.msra.mxu0 0.0
        %899 = vmatprep.subr.mxu0 0.0
        %900 = vmatpush1.msra.mxu0 0.0
        %901 = vmatprep.subr.mxu0 0.0
        %902 = vmatpush1.msra.mxu0 0.0
        %903 = vmatprep.subr.mxu0 0.0
        %904 = vmatpush1.msra.mxu0 0.0
        %905 = vmatprep.subr.mxu0 0.0
        %906 = vmatpush1.msra.mxu0 0.0
        %907 = vmatprep.subr.mxu0 0.0
        %908 = vmatpush1.msra.mxu0 0.0
        %909 = vmatprep.subr.mxu0 0.0
        %910 = vmatpush1.msra.mxu0 0.0
        %911 = vmatprep.subr.mxu0 0.0
        %912 = vmatpush1.msra.mxu0 0.0
        %913 = vmatprep.mubr.f32.mxu0 0.0
        %914 = vmatmul.mubr.f32.gmra.mrb[0].mxu0 %v705
        %v915 = vpop.f32.mrb[0].mxu0
        %v916 = vadd.f32 0.0, %v915
        %v917 = vpop.f32.mrb[0].mxu0
        %v918 = vadd.f32 0.0, %v917
        %919 = vdwg.mxu0
        %v926 = vcombine.low %v774, %v776
        %v927 = vcombine.low %v845, %v847
        %v928 = vcombine.low %v916, %v918
        %v930 = vunpack.c.l.s4 1966171168
        %v931 = vunpack.c.0.s8 %v930
        %v932 = vlaneseq
        %v933 = vshrl.u32 %v932, 7
        %v934 = vsub.s32 %v931, %v933
        %v935 = vrot.slane %v926, %v934
        %v937 = vunpack.c.l.s4 1966171168
        %v938 = vunpack.c.0.s8 %v937
        %v939 = vlaneseq
        %v940 = vshrl.u32 %v939, 7
        %v941 = vsub.s32 %v938, %v940
        %v942 = vrot.slane %v927, %v941
        %v944 = vunpack.c.l.s4 1966171168
        %v945 = vunpack.c.0.s8 %v944
        %v946 = vlaneseq
        %v947 = vshrl.u32 %v946, 7
        %v948 = vsub.s32 %v945, %v947
        %v949 = vrot.slane %v928, %v948
        %v950 = vcombine.low %v935, %v942
        %v952 = vunpack.c.l.s4 1966171168
        %v953 = vunpack.c.0.s8 %v952
        %v954 = vlaneseq
        %v955 = vshrl.u32 %v954, 7
        %v956 = vsub.s32 %v953, %v955
        %v957 = vrot.slane %v950, %v956
        %v959 = vunpack.c.l.s4 1966171168
        %v960 = vunpack.c.0.s8 %v959
        %v961 = vlaneseq
        %v962 = vshrl.u32 %v961, 7
        %v963 = vsub.s32 %v960, %v962
        %v964 = vrot.slane %v949, %v963
        %v965 = vcombine.low %v957, %v964
        %v967 = vadd.f32 %v702, %v965
        %v968 = vlaneseq
        %vm969 = vcmp.ge.s32.totalorder %v968, 0
        %vm970 = vcmp.lt.s32.totalorder %v968, 768
        %vm971 = vmand %vm969, %vm970
        %972 = vst.msk [vmem:[#allocation2] sm:$0x3f] %vm971, %v967
        %v973 = vld [vmem:[#allocation3] sm:$0x1]
        %vm974 = vcmask 253952
        %v975 = vsel %vm974, %v327, 0.0
        %976 = vadd.xlane.f32.xlu0 %v975
        %v977 = vpop.xlane.xlu0 %976
        %v978 = vadd.f32 %v973, %v977
        %vm979 = vcmask 0
        %980 = vst.msk [vmem:[#allocation3] sm:$0x1] %vm979, %v978
        // Predicated region
        $region41: #{tpu_custom_call.1} parent=35 // pred_check
          %p981 = pneg %p691
        $region42: #{tpu_custom_call.1} parent=35 // pred_check_branch
          %983 = sbr.rel (%p981) target = $region44
        $region43: #{tpu_custom_call.1} parent=35 // pred_region
          %v984 = vld [vmem:[#allocation2] sm:$0x3f]
          %v985 = vld [vmem:[#allocation3] sm:$0x1]
          %987 = vset.pattern.permute.xlu0 0
          %988 = vperm.xlu0 %987, %v985
          %v989 = vpop.permute.xlu0 %988
          %v991 = vlaneseq
          %v992 = vshrl.u32 %v991, 7
          %v993 = vsub.s32 0, %v992
          %v994 = vrot.slane %v989, %v993
          %v995 = vrcp.pop %v994
          %v996 = vmul.f32 %v984, %v995
          %997 = vst.msk [vmem:[%s275] sm:$0x3f] %vm971, %v996
        $region44: #{tpu_custom_call.1} parent=35 // pred_fallthru
          _
        %s998 = smul.u32 4, %s25
        %p999 = scmp.lt.s32.totalorder %s24, 1
        %s1000 = scalar_select %p999, %s24, 1
        %p1001 = scmp.lt.s32.totalorder %s998, 3
        %s1002 = scalar_select %p1001, %s998, 3
        %s1003 = smul.addr %s1000, 4
        %s1004 = sadd.s32 %s1002, %s1003
        %s1005 = smul.addr %s1004, 8
        %s1006 = scalar_lea.vmem %s4, %s1005
        %s1007 = sand.u32 %s166, 1
        %s1008 = scalar_lea.sflag [#allocation5], %s1007
        %s1009 = sand.u32 %s166, 1
        %s1010 = smul.addr %s1009, 6
        %s1011 = scalar_lea.vmem [#allocation4], %s1010
        // Predicated region
        $region45: #{tpu_custom_call.1} parent=35 // pred_check
          %p1012 = pneg %p150
        $region46: #{tpu_custom_call.1} parent=35 // pred_check_branch
          %1014 = sbr.rel (%p1012) target = $region48
        $region47: #{tpu_custom_call.1} parent=35 // pred_region
          %s1015 = smul.u32 4, %s25
        $region48: #{tpu_custom_call.1} parent=35 // pred_fallthru
          _
        // Predicated region
        $region49: #{tpu_custom_call.1} parent=35 // pred_check
          %p1016 = pneg %p176
        $region50: #{tpu_custom_call.1} parent=35 // pred_check_branch
          %1018 = sbr.rel (%p1016) target = $region52
        $region51: #{tpu_custom_call.1} parent=35 // pred_region
          %s1020 = ssub.s32 96, 96
          %1021 = vsyncadd %s1008, %s1020
          %s1022 = smul.addr %s24, 6
          %s1023 = smul.addr %s1022, 16
          %s1024 = scalar_lea.hbm %s5, %s1023
          %s1026 = sshll.u32 %s1011, 4
          %s1027 = int_to_ptr.vmem [resolvable:$true] %s1026
          %1029 = dma.vmem_to_hbm [thread:$0]  %s1027, 96, %s1024, %s1008
        $region52: #{tpu_custom_call.1} parent=35 // pred_fallthru
          _
      $region36: #{tpu_custom_call.1} parent=5 // pred_fallthru
        _
      %p1030 = scmp.le.s32.totalorder 2, %s15
      // Predicated region
      $region53: #{tpu_custom_call.1} parent=5 // pred_check
        %p1031 = pneg %p1030
      $region54: #{tpu_custom_call.1} parent=5 // pred_check_branch
        %1033 = sbr.rel (%p1031) target = $region56
      $region55: #{tpu_custom_call.1} parent=5 // pred_region
        %s1034 = ssub.s32 %s15, 2
        // Predicated region
        $region57: #{tpu_custom_call.1} parent=55 // pred_check
          %p1035 = pneg %p156
        $region58: #{tpu_custom_call.1} parent=55 // pred_check_branch
          %1037 = sbr.rel (%p1035) target = $region60
        $region59: #{tpu_custom_call.1} parent=55 // pred_region
          %s1038 = smul.u32 4, %s27
          %p1039 = scmp.lt.s32.totalorder %s26, 1
          %s1040 = scalar_select %p1039, %s26, 1
          %p1041 = scmp.lt.s32.totalorder %s1038, 3
          %s1042 = scalar_select %p1041, %s1038, 3
          %s1043 = smul.addr %s1040, 4
          %s1044 = sadd.s32 %s1042, %s1043
          %s1045 = smul.addr %s1044, 8
          %s1046 = scalar_lea.vmem %s4, %s1045
        $region60: #{tpu_custom_call.1} parent=55 // pred_fallthru
          _
        // Predicated region
        $region61: #{tpu_custom_call.1} parent=55 // pred_check
          %p1047 = pneg %p182
        $region62: #{tpu_custom_call.1} parent=55 // pred_check_branch
          %1049 = sbr.rel (%p1047) target = $region64
        $region63: #{tpu_custom_call.1} parent=55 // pred_region
          %s1050 = sand.u32 %s167, 1
          %s1051 = scalar_lea.sflag [#allocation5], %s1050
          %s1052 = sand.u32 %s167, 1
          %s1053 = smul.addr %s1052, 6
          %s1054 = scalar_lea.vmem [#allocation4], %s1053
          %1055 = dma.done %s1051, 96
        $region64: #{tpu_custom_call.1} parent=55 // pred_fallthru
          _
      $region56: #{tpu_custom_call.1} parent=5 // pred_fallthru
        _
    $region6: #{tpu_custom_call.1} parent=1 // loop_footer
      %s19 = sadd.s32 1, %s15
    $region7: #{tpu_custom_call.1} parent=1 // loop_footer_branch
      %14 = sbr.rel target = $region3
    $region8: #{tpu_custom_call.1} parent=1 // loop_exit
      _
    %1056 = vsyncpa [#allocation5], 1
    %s1057 = scalar_lea.sflag [#allocation5], 1
    %1058 = vsyncpa %s1057, 1

</llo_original>
